<compile_context>
chip_gen: v7x
topology: tpu7x:2x2x1
jax: 0.10.0
libtpu: 0.0.40
codegen_flags: <defaults>
</compile_context>

<pallas_src>
import jax
import jax.numpy as jnp
from jax.experimental import pallas as pl
from jax.experimental.pallas import tpu as pltpu

_TARGET_BLOCK_BYTES = 4 << 20          # ~4 MiB per block
_VMEM_LIMIT_BYTES = 32 << 20           # safe on v5e/v6e (128 MiB) and v7x (64 MiB)
_SMALL_FAST_PATH_BYTES = 256 * 1024    # below this, pallas launch overhead dominates


def _sublane_multiple(dtype) -> int:
    """Min sublane tile: 8 for 32-bit, 16 for 16-bit, 32 for 8-bit dtypes."""
    bits = jnp.dtype(dtype).itemsize * 8
    return max(8, 256 // bits)


def _relu_kernel(x_ref, o_ref):
    # Single elementwise VPU max per vreg, dtype-matched zero (no promotion).
    o_ref[...] = jnp.maximum(x_ref[...], jnp.zeros((), dtype=x_ref.dtype))


def _relu_pallas(y):
    """relu over a (B, N) array, tiled along the batch (row) dim only.

    The last block dim always equals the full array dim N, which is legal
    regardless of the (8,128) rule and keeps stores lane-dense without any
    repacking.
    """
    b, n = y.shape
    itemsize = jnp.dtype(y.dtype).itemsize
    sub = _sublane_multiple(y.dtype)

    if b <= 2 * sub or b * n * itemsize <= _TARGET_BLOCK_BYTES:
        # Single full-array block: always a legal block shape, grid of 1.
        block_rows = b
    else:
        # Target ~4 MiB blocks, but guarantee >= 2 grid steps so v7x's two
        # TensorCores can both be used on the "parallel" axis.
        row_bytes = max(1, n * itemsize)
        target_rows = max(sub, _TARGET_BLOCK_BYTES // row_bytes)
        num_blocks = max(2, pl.cdiv(b, target_rows))
        block_rows = pl.cdiv(b, num_blocks)
        block_rows = max(sub, ((block_rows + sub - 1) // sub) * sub)
        block_rows = min(block_rows, b)

    grid = (pl.cdiv(b, block_rows),)

    return pl.pallas_call(
        _relu_kernel,
        out_shape=jax.ShapeDtypeStruct((b, n), y.dtype),
        grid=grid,
        in_specs=[pl.BlockSpec((block_rows, n), lambda i: (i, 0),
                               memory_space=pltpu.VMEM)],
        out_specs=pl.BlockSpec((block_rows, n), lambda i: (i, 0),
                               memory_space=pltpu.VMEM),
        compiler_params=pltpu.CompilerParams(
            dimension_semantics=("parallel",),
            vmem_limit_bytes=_VMEM_LIMIT_BYTES),
    )(y)


def model_forward(x, *, force_pallas=False):
    """Reproduces Model.forward: flatten to (B, -1) then relu."""
    b = x.shape[0]
    y = x.reshape(b, -1)  # (B, C*L) -- glue reshape in JAX

    if (not force_pallas
            and y.size * jnp.dtype(y.dtype).itemsize < _SMALL_FAST_PATH_BYTES):
        # Tiny input: a fused XLA relu beats any kernel-launch overhead.
        return jnp.maximum(y, jnp.zeros((), dtype=y.dtype))

    return _relu_pallas(y)


if __name__ == "__main__":
    key = jax.random.PRNGKey(0)
    x = jax.random.normal(key, (2, 3, 4), dtype=jnp.float32)

    # Exercise the Pallas kernel explicitly.
    out = model_forward(x, force_pallas=True)
    jax.block_until_ready(out)

    # Pure-JAX reference.
    ref = jnp.maximum(x.reshape(x.shape[0], -1), 0.0)
    assert out.shape == (2, 12), out.shape
    assert jnp.allclose(out, ref), "pallas path mismatch vs reference"

    # Auto path (small-input fast path) must also match.
    out2 = model_forward(x)
    jax.block_until_ready(out2)
    assert jnp.allclose(out2, ref), "fast path mismatch vs reference"

    print("KERNEL_OK")
</pallas_src>

<mosaic_0001>
module attributes {stable_mosaic.version = 11 : i64} {
  func.func @_relu_kernel(%arg0: i32, %arg1: memref<2x12xf32, #tpu.memory_space<vmem>>, %arg2: memref<2x12xf32, #tpu.memory_space<vmem>>) attributes {dimension_semantics = [#tpu.dimension_semantics<parallel>], iteration_bounds = array<i64: 1>, scalar_prefetch = 0 : i64, scratch_operands = 0 : i64, tpu.core_type = #tpu.core_type<tc>, window_params = [{transform_indices = @transform_0, window_bounds = array<i64: 2, 12>}, {transform_indices = @transform_1, window_bounds = array<i64: 2, 12>}]} {
    %c0 = arith.constant 0 : index
    %c0_0 = arith.constant 0 : index
    %0 = vector.load %arg1[%c0, %c0_0] : memref<2x12xf32, #tpu.memory_space<vmem>>, vector<2x12xf32>
    %cst = arith.constant 0.000000e+00 : f32
    %1 = vector.broadcast %cst : f32 to vector<2x12xf32>
    %2 = arith.maximumf %0, %1 : vector<2x12xf32>
    %c0_1 = arith.constant 0 : index
    %c0_2 = arith.constant 0 : index
    %3 = vector.load %arg2[%c0_1, %c0_2] : memref<2x12xf32, #tpu.memory_space<vmem>>, vector<2x12xf32>
    tpu.vector_store %arg2[%c0_1, %c0_2], %2 {strides = array<i32>} : memref<2x12xf32, #tpu.memory_space<vmem>>, vector<2x12xf32>,
    return
  }
  func.func @transform_0(%arg0: i32) -> (i32, i32) {
    %c0_i32 = arith.constant 0 : i32
    %c0_i32_0 = arith.constant 0 : i32
    return %arg0, %c0_i32 : i32, i32
  }
  func.func @transform_1(%arg0: i32) -> (i32, i32) {
    %c0_i32 = arith.constant 0 : i32
    %c0_i32_0 = arith.constant 0 : i32
    return %arg0, %c0_i32 : i32, i32
  }
}

</mosaic_0001>

<llo_original>
// kernel: tpu_custom_call.1
$region0: #{tpu_custom_call.1}
  #allocation0 [shape = 'u32[]', space=smem, size = 0x4, offset = 0x4, fixed_abs, tag = 'smem constant byte address 0x4 - core index']
  #allocation1 [shape = 'u32[144,128]{1,0:T(1,128)}', space=vmem, size = 0x12000, scoped, tag = 'internal scratch']
  %s0 = inlined_call_operand.hbm [shape: f32[2,12], index: 0, kind: input, shape index: {}]
  %s1 = inlined_call_operand.hbm [shape: f32[2,12], index: 1, kind: output, shape index: {}]
  %s2 = sld [smem:[#allocation0]]
  $region18: #{tpu_custom_call.1} parent=0
    _
  %s4 = ssub.s32 1, %s2
  %s5 = scalar_select 0, %s4, %s2
  $region1: #{tpu_custom_call.1} parent=0
    #allocation2 [shape = 'u8[1024]{0}', space=vmem, size = 0x400, scoped, tag = 'input window, operand 0, single buffered']
    #allocation3 [shape = 's32[1]{0}', space=sflag, size = 0x4, scoped, tag = 'scoped memory for tpu_custom_call.1']
    #allocation4 [shape = 's32[1]{0}', space=sflag, size = 0x4, scoped, tag = 'scoped memory for tpu_custom_call.1']
    #allocation5 [shape = 'u8[1024]{0}', space=vmem, size = 0x400, scoped, tag = 'output window, operand 0, single buffered']
    %6 = vsyncpa [#allocation3], 0
    %7 = vsyncpa [#allocation4], 0
    // Predicated region
    $region2: #{tpu_custom_call.1} parent=1 // pred_check
      _
    $region3: #{tpu_custom_call.1} parent=1 // pred_check_branch
      %9 = sbr.rel (0) target = $region5
    $region4: #{tpu_custom_call.1} parent=1 // pred_region
      %s11 = ssub.s32 32, 32
      %12 = vsyncadd [#allocation3], %s11
      %s14 = sshll.u32 [#allocation2], 4
      %s15 = int_to_ptr.vmem [resolvable:$true] %s14
      %17 = dma.hbm_to_vmem [thread:$0]  %s0, 32, %s15, [#allocation3]
    $region5: #{tpu_custom_call.1} parent=1 // pred_fallthru
      _
    // Predicated region
    $region6: #{tpu_custom_call.1} parent=1 // pred_check
      _
    $region7: #{tpu_custom_call.1} parent=1 // pred_check_branch
      %19 = sbr.rel (0) target = $region9
    $region8: #{tpu_custom_call.1} parent=1 // pred_region
      %20 = dma.done [#allocation3], 32
    $region9: #{tpu_custom_call.1} parent=1 // pred_fallthru
      _
    %v21 = vld [vmem:[#allocation2] sm:$0x3]
    %v22 = vmax.f32 %v21, 0.0
    %vm23 = vcmask 91136
    %24 = vst.msk [vmem:[#allocation5] sm:$0x3] %vm23, %v22
    // Predicated region
    $region10: #{tpu_custom_call.1} parent=1 // pred_check
      _
    $region11: #{tpu_custom_call.1} parent=1 // pred_check_branch
      %26 = sbr.rel (0) target = $region13
    $region12: #{tpu_custom_call.1} parent=1 // pred_region
      %s28 = ssub.s32 32, 32
      %29 = vsyncadd [#allocation4], %s28
      %s31 = sshll.u32 [#allocation5], 4
      %s32 = int_to_ptr.vmem [resolvable:$true] %s31
      %34 = dma.vmem_to_hbm [thread:$0]  %s32, 32, %s1, [#allocation4]
    $region13: #{tpu_custom_call.1} parent=1 // pred_fallthru
      _
    // Predicated region
    $region14: #{tpu_custom_call.1} parent=1 // pred_check
      _
    $region15: #{tpu_custom_call.1} parent=1 // pred_check_branch
      %36 = sbr.rel (0) target = $region17
    $region16: #{tpu_custom_call.1} parent=1 // pred_region
      %37 = dma.done [#allocation4], 32
    $region17: #{tpu_custom_call.1} parent=1 // pred_fallthru
      _
    %38 = vsyncpa [#allocation3], 1
    %39 = vsyncpa [#allocation4], 1

</llo_original>
